<compile_context>
chip_gen: v7x
topology: tpu7x:2x2x1
jax: 0.10.0
libtpu: 0.0.40
codegen_flags: <defaults>
</compile_context>

<pallas_src>
import math

import jax
import jax.numpy as jnp
import numpy as np
from jax.experimental import pallas as pl
from jax.experimental.pallas import tpu as pltpu


# ----------------------------------------------------------------------------
# pltpu.roll convention probe (tiny one-off kernel, cached)
# ----------------------------------------------------------------------------
_ROLL_NUMPY_CONVENTION = None


def _roll_matches_numpy():
    """True iff pltpu.roll(x, s) == jnp.roll(x, s) (shift toward higher idx)."""
    global _ROLL_NUMPY_CONVENTION
    if _ROLL_NUMPY_CONVENTION is None:
        def probe(x_ref, o_ref):
            o_ref[...] = pltpu.roll(x_ref[...], 1, axis=1)

        with jax.ensure_compile_time_eval():
            x = jnp.tile(jnp.arange(128, dtype=jnp.float32)[None, :], (8, 1))
            out = pl.pallas_call(
                probe, out_shape=jax.ShapeDtypeStruct((8, 128), jnp.float32))(x)
            _ROLL_NUMPY_CONVENTION = bool(out[0, 0] == 127.0)
    return _ROLL_NUMPY_CONVENTION


def _border_masks(H, W):
    """(9, H*W) masks: tap (dy,dx) valid where (i+dy-1, j+dx-1) is in-image."""
    ii = np.repeat(np.arange(H), W)
    jj = np.tile(np.arange(W), H)
    m = np.zeros((9, H * W), np.float32)
    for dy in range(3):
        for dx in range(3):
            ok = ((ii + dy - 1 >= 0) & (ii + dy - 1 < H)
                  & (jj + dx - 1 >= 0) & (jj + dx - 1 < W))
            m[dy * 3 + dx] = ok.astype(np.float32)
    return m


# ----------------------------------------------------------------------------
# Fused attention + convblock + deconv kernel (channel-major, one grid step / b)
# ----------------------------------------------------------------------------
def _decoder1_fused(it, iw, e, fl, params, H, W):
    B, C, HW = it.shape
    numpy_roll = _roll_matches_numpy()
    masks = jnp.asarray(_border_masks(H, W))

    wqkv_i, wqkv_e, wo_i, wo_e = params["attn"]
    cw, cb, ca = params["cw"], params["cb"], params["ca"]
    wd, bd = params["dc_w"], params["dc_b"]

    def kernel(it_ref, iw_ref, e_ref, fl_ref, m_ref,
               wqkv_i_ref, wqkv_e_ref, wo_i_ref, wo_e_ref,
               w0, b0, a0, w1, b1, a1, w2, b2, a2,
               w3, b3, a3, w4, b4, a4, w5, b5, a_out,
               wd_ref, bd_ref,
               o_ref, x0_ref):
        bf = jnp.bfloat16
        masks_v = m_ref[...]                                   # (9, HW) f32

        # ---------------- symmetric cross-modal attention ----------------
        iwT = iw_ref[0]                                        # (C, HW) I0_warp
        eT = e_ref[0]                                          # (C, HW) E
        qkv_i = jnp.dot(wqkv_i_ref[...], iwT.astype(bf),
                        preferred_element_type=jnp.float32)    # (3C, HW)
        qkv_e = jnp.dot(wqkv_e_ref[...], eT.astype(bf),
                        preferred_element_type=jnp.float32)

        def attend(qT, kT, vT):
            # scores with keys on sublanes, queries on lanes (stays lane-dense)
            z = jnp.dot(jnp.transpose(kT).astype(bf), qT.astype(bf),
                        preferred_element_type=jnp.float32)    # (Nk, Nq)
            zmax = jnp.max(z, axis=0, keepdims=True)
            ez = jnp.exp(z - zmax)
            denom = jnp.sum(ez, axis=0, keepdims=True)
            p = ez * pl.reciprocal(denom, approx=True)         # EUP slot
            return jnp.dot(vT.astype(bf), p.astype(bf),
                           preferred_element_type=jnp.float32)  # (C, Nq)

        qiT, kiT, viT = qkv_i[0:C], qkv_i[C:2 * C], qkv_i[2 * C:3 * C]
        qeT, keT, veT = qkv_e[0:C], qkv_e[C:2 * C], qkv_e[2 * C:3 * C]
        aiT = jnp.dot(wo_i_ref[...], attend(qiT, keT, veT).astype(bf),
                      preferred_element_type=jnp.float32)      # AI (img q -> evt kv)
        aeT = jnp.dot(wo_e_ref[...], attend(qeT, kiT, viT).astype(bf),
                      preferred_element_type=jnp.float32)      # AE (evt q -> img kv)

        # f_in = cat([It_, AE + I0_warp, AI + E, up_flow0], channels) -- rows,
        # sublane-aligned offsets (0/24/48/72), no lane relayout.
        fin = jnp.concatenate([it_ref[0], aeT + iwT, aiT + eT, fl_ref[0]],
                              axis=0)                          # (74, HW) f32

        # -------------- 3x3 "same" convs via roll-based im2col --------------
        def conv3x3(x, w_ref, b_ref, alpha_ref=None, residual=None):
            acc = None
            for dy in range(3):
                for dx in range(3):
                    t = dy * 3 + dx
                    s = (dy - 1) * W + (dx - 1)
                    if s == 0:
                        shifted = x
                    else:
                        amt = (-s) % HW if numpy_roll else s % HW
                        shifted = pltpu.roll(x, amt, axis=1)   # XLU lane rotate
                    if t != 4:                                 # center mask == 1
                        shifted = shifted * masks_v[t:t + 1, :]
                    part = jnp.dot(w_ref[t], shifted.astype(bf),
                                   preferred_element_type=jnp.float32)
                    acc = part if acc is None else acc + part
            acc = acc + b_ref[...]
            if residual is not None:
                acc = acc + residual
            if alpha_ref is not None:                          # fused PReLU
                acc = jnp.where(acc >= 0.0, acc, alpha_ref[...] * acc)
            return acc                                         # (Cout, HW) f32

        # conv(74,48) + ResBlock(48,24)
        x0 = conv3x3(fin, w0, b0, a0)                          # (48, HW)
        x0_ref[...] = x0                                       # park residual in VMEM

        h = conv3x3(x0, w1, b1, a1)
        sde = conv3x3(h[24:48, :], w2, b2, a2)
        h = jnp.concatenate([h[0:24, :], sde], axis=0)         # sublane-aligned splice
        h = conv3x3(h, w3, b3, a3)
        sde = conv3x3(h[24:48, :], w4, b4, a4)
        h = jnp.concatenate([h[0:24, :], sde], axis=0)
        h = conv3x3(h, w5, b5, alpha_ref=a_out, residual=x0_ref[...])

        # ConvTranspose2d(48,7,4,2,1) as one parity-packed structured conv
        o_ref[0] = conv3x3(h, wd_ref, bd_ref)                  # (28, HW), lane-dense

    def act_spec(c):
        return pl.BlockSpec((1, c, HW), lambda i: (i, 0, 0))

    def full_spec(a):
        nd = a.ndim
        return pl.BlockSpec(a.shape, lambda i: (0,) * nd)

    weight_args = [wqkv_i, wqkv_e, wo_i, wo_e]
    for k in range(6):
        weight_args += [cw[k], cb[k], ca[k]]
    weight_args += [wd, bd]

    in_specs = ([act_spec(C), act_spec(C), act_spec(C), act_spec(2),
                 full_spec(masks)] + [full_spec(a) for a in weight_args])

    return pl.pallas_call(
        kernel,
        out_shape=jax.ShapeDtypeStruct((B, 28, HW), jnp.float32),
        grid=(B,),
        in_specs=in_specs,
        out_specs=pl.BlockSpec((1, 28, HW), lambda i: (i, 0, 0)),
        scratch_shapes=[pltpu.VMEM((48, HW), jnp.float32)],    # x0 residual
        compiler_params=pltpu.CompilerParams(
            dimension_semantics=("parallel",)),
    )(it, iw, e, fl, masks, *weight_args)


# ----------------------------------------------------------------------------
# Warp (plain JAX) -- data-dependent gather
# ----------------------------------------------------------------------------
def warp_nchw(x, flow):
    """Bilinear backward warp (zero outside) + coverage mask, NCHW.

    x: (B,C,H,W); flow: (B,2,H,W) with flow[:,0]=dx, flow[:,1]=dy.
    """
    # TODO(synk): data-dependent gather kept in XLA; a Pallas DMA-gather version
    #             is a possible follow-up, irrelevant at 16x16.
    B, C, H, W = x.shape
    gy, gx = jnp.meshgrid(jnp.arange(H, dtype=jnp.float32),
                          jnp.arange(W, dtype=jnp.float32), indexing="ij")
    vx = gx[None] + flow[:, 0]
    vy = gy[None] + flow[:, 1]
    x0f = jnp.floor(vx)
    y0f = jnp.floor(vy)
    wx1 = vx - x0f
    wx0 = 1.0 - wx1
    wy1 = vy - y0f
    wy0 = 1.0 - wy1

    def sample(img, ix, iy):
        valid = (ix >= 0.0) & (ix <= W - 1.0) & (iy >= 0.0) & (iy <= H - 1.0)
        ic = jnp.clip(ix, 0.0, W - 1.0).astype(jnp.int32)
        jc = jnp.clip(iy, 0.0, H - 1.0).astype(jnp.int32)
        vals = img[:, jc, ic]                                  # (C, H, W)
        return vals * valid[None].astype(img.dtype), valid.astype(jnp.float32)

    def per_batch(img, x0, y0, w00, w01, w10, w11):
        v00, m00 = sample(img, x0, y0)
        v01, m01 = sample(img, x0 + 1.0, y0)
        v10, m10 = sample(img, x0, y0 + 1.0)
        v11, m11 = sample(img, x0 + 1.0, y0 + 1.0)
        out = (v00 * w00[None] + v01 * w01[None]
               + v10 * w10[None] + v11 * w11[None])
        cov = m00 * w00 + m01 * w01 + m10 * w10 + m11 * w11
        return out, cov

    warped, cov = jax.vmap(per_batch)(x, x0f, y0f,
                                      wx0 * wy0, wx1 * wy0, wx0 * wy1, wx1 * wy1)
    return warped, cov < 0.999


# ----------------------------------------------------------------------------
# Decoder1 forward (NCHW in / NCHW out, like the PyTorch reference)
# ----------------------------------------------------------------------------
def decoder1_forward(params, It_, I0, E, up_flow0):
    B, C, H, W = It_.shape
    HW = H * W

    # warp + fill invalid regions with It_
    i0_warp, invalid = warp_nchw(I0, up_flow0)
    i0_warp = jnp.where(invalid[:, None, :, :], It_, i0_warp)

    packed = _decoder1_fused(It_.reshape(B, C, HW),
                             i0_warp.reshape(B, C, HW),
                             E.reshape(B, C, HW),
                             up_flow0.reshape(B, 2, HW),
                             params, H, W)                     # (B, 28, HW)

    # Un-pack deconv parities; this single transpose also yields NCHW.
    out = packed.reshape(B, 2, 2, 7, H, W)                     # (b, pa, pb, co, i, j)
    out = jnp.transpose(out, (0, 3, 4, 1, 5, 2))               # (b, co, i, pa, j, pb)
    return out.reshape(B, 7, 2 * H, 2 * W)


# ----------------------------------------------------------------------------
# Deterministic synthetic parameters (PReLU slope 0.25, zero biases)
# ----------------------------------------------------------------------------
_DECONV_KH = {0: (1, 3), 1: (0, 2)}      # output parity -> kernel taps
_DECONV_SH = {0: (0, -1), 1: (1, 0)}     # output parity -> input shifts


def init_params(key):
    keys = iter(jax.random.split(key, 24))

    def rnd(shape, fan_in):
        return jax.random.normal(next(keys), shape, jnp.float32) / math.sqrt(fan_in)

    dim = 24
    scale = 1.0 / math.sqrt(dim)

    def qkv():
        # softmax 1/sqrt(dim) folded into the q rows of the fused qkv weight.
        wq = rnd((dim, dim), dim) * scale
        wk = rnd((dim, dim), dim)
        wv = rnd((dim, dim), dim)
        return jnp.concatenate([wq, wk, wv], axis=0).astype(jnp.bfloat16)  # (72,24)

    wqkv_i = qkv()
    wqkv_e = qkv()
    wo_i = rnd((dim, dim), dim).astype(jnp.bfloat16)
    wo_e = rnd((dim, dim), dim).astype(jnp.bfloat16)

    def conv_w(cin, cout):
        # (3,3,cin,cout) -> per-tap channel-major layout (9, cout, cin), bf16.
        w = rnd((3, 3, cin, cout), cin * 9)
        return jnp.transpose(w.reshape(9, cin, cout), (0, 2, 1)).astype(jnp.bfloat16)

    def zeros_b(c):
        return jnp.zeros((c, 1), jnp.float32)

    def prelu(c):
        return jnp.full((c, 1), 0.25, jnp.float32)

    cw = [conv_w(74, 48), conv_w(48, 48), conv_w(24, 24),
          conv_w(48, 48), conv_w(24, 24), conv_w(48, 48)]
    cb = [zeros_b(48), zeros_b(48), zeros_b(24), zeros_b(48), zeros_b(24), zeros_b(48)]
    ca = [prelu(48), prelu(48), prelu(24), prelu(48), prelu(24), prelu(48)]

    # ConvTranspose2d(48,7,4,2,1) re-packed as a structured "3x3 conv" with 28
    # parity-packed outputs: row (pa*2+pb)*7+co of shift tap (sh,sw) carries
    # kernel tap (kh,kw) of output parity (pa,pb).
    # TODO(synk): verify the PyTorch (Cin,Cout,kH,kW) layout when loading real
    #             checkpoints; synthetic weights use w[kh,kw,ci,co].
    dc = np.asarray(rnd((4, 4, 48, 7), 48 * 16))
    wd = np.zeros((9, 28, 48), np.float32)
    for pa in range(2):
        for pb in range(2):
            for ih, sh in enumerate(_DECONV_SH[pa]):
                kh = _DECONV_KH[pa][ih]
                for iw_, sw in enumerate(_DECONV_SH[pb]):
                    kw = _DECONV_KH[pb][iw_]
                    t = (sh + 1) * 3 + (sw + 1)
                    r0 = (pa * 2 + pb) * 7
                    wd[t, r0:r0 + 7, :] = dc[kh, kw].T
    return {
        "attn": (wqkv_i, wqkv_e, wo_i, wo_e),
        "cw": cw, "cb": cb, "ca": ca,
        "dc_w": jnp.asarray(wd).astype(jnp.bfloat16),
        "dc_b": jnp.zeros((28, 1), jnp.float32),
    }


if __name__ == "__main__":
    key = jax.random.PRNGKey(0)
    k1, k2, k3, k4, kp = jax.random.split(key, 5)
    B, C, H, W = 2, 24, 16, 16          # dim=24 forced by attention; 3*24+2=74
    It_ = jax.random.normal(k1, (B, C, H, W), jnp.float32)
    I0 = jax.random.normal(k2, (B, C, H, W), jnp.float32)
    E = jax.random.normal(k3, (B, C, H, W), jnp.float32)
    up_flow0 = jax.random.normal(k4, (B, 2, H, W), jnp.float32) * 2.0

    params = init_params(kp)
    _roll_matches_numpy()               # run the one-off roll-convention probe eagerly
    fwd = jax.jit(decoder1_forward)
    out = jax.block_until_ready(fwd(params, It_, I0, E, up_flow0))
    assert out.shape == (B, 7, 2 * H, 2 * W), out.shape
    assert bool(jnp.isfinite(out).all())
    print("KERNEL_OK")
</pallas_src>

<mosaic_0001>
module attributes {stable_mosaic.version = 11 : i64} {
  func.func @probe(%arg0: memref<8x128xf32, #tpu.memory_space<vmem>>, %arg1: memref<8x128xf32, #tpu.memory_space<vmem>>) attributes {dimension_semantics = [], scalar_prefetch = 0 : i64, scratch_operands = 0 : i64, tpu.core_type = #tpu.core_type<tc>} {
    %c0 = arith.constant 0 : index
    %c0_0 = arith.constant 0 : index
    %0 = vector.load %arg0[%c0, %c0_0] : memref<8x128xf32, #tpu.memory_space<vmem>>, vector<8x128xf32>
    %c1_i32 = arith.constant 1 : i32
    %1 = tpu.dynamic_rotate %0 by %c1_i32 dim 1 : vector<8x128xf32>, i32 -> vector<8x128xf32>
    %c0_1 = arith.constant 0 : index
    %c0_2 = arith.constant 0 : index
    %2 = vector.load %arg1[%c0_1, %c0_2] : memref<8x128xf32, #tpu.memory_space<vmem>>, vector<8x128xf32>
    tpu.vector_store %arg1[%c0_1, %c0_2], %1 {strides = array<i32>} : memref<8x128xf32, #tpu.memory_space<vmem>>, vector<8x128xf32>,
    return
  }
}

</mosaic_0001>

<llo_original>
// kernel: tpu_custom_call.1
$region0: #{tpu_custom_call.1}
  #allocation0 [shape = 'u32[]', space=smem, size = 0x4, offset = 0x4, fixed_abs, tag = 'smem constant byte address 0x4 - core index']
  #allocation1 [shape = 'u32[144,128]{1,0:T(1,128)}', space=vmem, size = 0x12000, scoped, tag = 'internal scratch']
  %s0 = inlined_call_operand.hbm [shape: f32[8,128], index: 0, kind: input, shape index: {}]
  %s1 = inlined_call_operand.hbm [shape: f32[8,128], index: 1, kind: output, shape index: {}]
  %s2 = sld [smem:[#allocation0]]
  $region18: #{tpu_custom_call.1} parent=0
    _
  %s4 = ssub.s32 1, %s2
  %s5 = scalar_select 0, %s4, %s2
  $region1: #{tpu_custom_call.1} parent=0
    #allocation2 [shape = 'u8[4096]{0}', space=vmem, size = 0x1000, scoped, tag = 'input window, operand 0, single buffered']
    #allocation3 [shape = 's32[1]{0}', space=sflag, size = 0x4, scoped, tag = 'scoped memory for tpu_custom_call.1']
    #allocation4 [shape = 's32[1]{0}', space=sflag, size = 0x4, scoped, tag = 'scoped memory for tpu_custom_call.1']
    #allocation5 [shape = 'u8[4096]{0}', space=vmem, size = 0x1000, scoped, tag = 'output window, operand 0, single buffered']
    %6 = vsyncpa [#allocation3], 0
    %7 = vsyncpa [#allocation4], 0
    // Predicated region
    $region2: #{tpu_custom_call.1} parent=1 // pred_check
      _
    $region3: #{tpu_custom_call.1} parent=1 // pred_check_branch
      %9 = sbr.rel (0) target = $region5
    $region4: #{tpu_custom_call.1} parent=1 // pred_region
      %s11 = ssub.s32 128, 128
      %12 = vsyncadd [#allocation3], %s11
      %s14 = sshll.u32 [#allocation2], 4
      %s15 = int_to_ptr.vmem [resolvable:$true] %s14
      %17 = dma.hbm_to_vmem [thread:$0]  %s0, 128, %s15, [#allocation3]
    $region5: #{tpu_custom_call.1} parent=1 // pred_fallthru
      _
    // Predicated region
    $region6: #{tpu_custom_call.1} parent=1 // pred_check
      _
    $region7: #{tpu_custom_call.1} parent=1 // pred_check_branch
      %19 = sbr.rel (0) target = $region9
    $region8: #{tpu_custom_call.1} parent=1 // pred_region
      %20 = dma.done [#allocation3], 128
    $region9: #{tpu_custom_call.1} parent=1 // pred_fallthru
      _
    %v21 = vld [vmem:[#allocation2] sm:$0xff]
    %22 = vrot.lane.b32.xlu0 %v21, 1
    %v23 = vpop.permute.xlu0 %22
    %24 = vst [vmem:[#allocation5] sm:$0xff] %v23
    // Predicated region
    $region10: #{tpu_custom_call.1} parent=1 // pred_check
      _
    $region11: #{tpu_custom_call.1} parent=1 // pred_check_branch
      %26 = sbr.rel (0) target = $region13
    $region12: #{tpu_custom_call.1} parent=1 // pred_region
      %s28 = ssub.s32 128, 128
      %29 = vsyncadd [#allocation4], %s28
      %s31 = sshll.u32 [#allocation5], 4
      %s32 = int_to_ptr.vmem [resolvable:$true] %s31
      %34 = dma.vmem_to_hbm [thread:$0]  %s32, 128, %s1, [#allocation4]
    $region13: #{tpu_custom_call.1} parent=1 // pred_fallthru
      _
    // Predicated region
    $region14: #{tpu_custom_call.1} parent=1 // pred_check
      _
    $region15: #{tpu_custom_call.1} parent=1 // pred_check_branch
      %36 = sbr.rel (0) target = $region17
    $region16: #{tpu_custom_call.1} parent=1 // pred_region
      %37 = dma.done [#allocation4], 128
    $region17: #{tpu_custom_call.1} parent=1 // pred_fallthru
      _
    %38 = vsyncpa [#allocation3], 1
    %39 = vsyncpa [#allocation4], 1

</llo_original>
